<compile_context>
chip_gen: v6e
topology: v6e:2x2x1
jax: 0.10.0
libtpu: 0.0.40
codegen_flags: <defaults>
</compile_context>

<pallas_src>
import jax
import jax.numpy as jnp
from jax.experimental import pallas as pl
from jax.experimental.pallas import tpu as pltpu

_LANE = 128
_ROW_ALIGN = 256  # row-tile granularity (multiple of the 8-sublane tile)


def _cdiv(a, b):
    return -(-a // b)


def _round_up(a, m):
    return _cdiv(a, m) * m


def _vmem_budget():
    """Generation-aware (buffer_budget_bytes, vmem_limit_bytes)."""
    cap = None
    try:
        cap = pltpu.get_tpu_info().vmem_capacity_bytes
    except Exception:
        cap = None  # unknown generation -> stay conservative
    if cap is not None and cap > 96 * 1024 * 1024:
        # v5e / v6e: 128 MiB physical VMEM per TensorCore.
        return 64 * 1024 * 1024, 100 * 1024 * 1024
    # v7x (64 MiB physical per TC) or unknown: stay well clear of the ceiling.
    return 36 * 1024 * 1024, 48 * 1024 * 1024


def _pick_tile_rows(n_rows, row_bytes_in, row_bytes_out, buffer_budget):
    """Rows per grid step, sized from (lane-padded) bytes, double-buffered in+out."""
    per_row = 2 * (row_bytes_in + row_bytes_out)  # double-buffered input + output
    tile = max(_ROW_ALIGN, (buffer_budget // per_row) // _ROW_ALIGN * _ROW_ALIGN)
    if n_rows >= 8 * _ROW_ALIGN:
        # Keep >= ~4 grid steps (and nudge the count even) so the 'parallel'
        # row axis keeps both v7x TensorCores busy.
        tile = min(tile, _round_up(_cdiv(n_rows, 4), _ROW_ALIGN))
        if _cdiv(n_rows, tile) % 2 and tile > _ROW_ALIGN:
            alt = tile - _ROW_ALIGN
            if _cdiv(n_rows, alt) % 2 == 0:
                tile = alt
    if tile >= n_rows:
        return max(n_rows, 1)  # single full-extent block
    return tile


def _linear_bias_kernel(x_ref, w_ref, b_ref, o_ref):
    """o = x @ w + b.

    x_ref: (tile_rows, K) streamed rows (untransposed MXU LHS; K on the lane dim).
    w_ref: (K, out_cols) resident weight (block-diagonal on the lane-packed path).
    b_ref: (1, 1) bias scalar in SMEM.
    o_ref: (tile_rows, out_cols) float32.
    """
    y = jnp.dot(x_ref[...], w_ref[...], preferred_element_type=jnp.float32)
    o_ref[...] = (y + b_ref[0, 0]).astype(o_ref.dtype)


def netreg_forward(x, weight, bias, *, tile_rows=None, stream_bf16=False):
    """Pallas NetReg.forward: y = x @ W^T + b.

    x:      (N, D)  float32 (mirrors torch.tensor(x, dtype=float32))
    weight: (1, D)  float32 (torch nn.Linear layout: (out_features, in_features))
    bias:   (1,) or scalar float32
    returns (N, 1) float32

    tile_rows: rows of the streamed operand per grid step (packed rows on the
    lane-packed path).  stream_bf16=True streams x / W as bfloat16 with f32 MXU
    accumulation (~2x less HBM traffic); opt-in because it perturbs numerics
    (~1e-3 relative) vs the f32 PyTorch reference.
    """
    x = jnp.asarray(x, dtype=jnp.float32)
    weight = jnp.asarray(weight, dtype=jnp.float32).reshape(1, -1)
    bias_s = jnp.asarray(bias, dtype=jnp.float32).reshape(1, 1)

    n, d = x.shape
    in_dtype = jnp.bfloat16 if stream_bf16 else jnp.float32
    itemsize = 2 if stream_bf16 else 4
    buffer_budget, vmem_limit = _vmem_budget()

    use_packed = (0 < d <= _LANE) and (_LANE % d == 0) and n > 0 and (n % (_LANE // d) == 0)

    if use_packed:
        # Lane packing: (N, D) -> (N*D/128, 128) free contiguous reshape;
        # column k of the block-diagonal weight holds w in lanes k*D..(k+1)*D-1.
        group = _LANE // d
        rows = n // group
        out_cols = group
        x_in = x.reshape(rows, _LANE).astype(in_dtype)
        w_row = weight.reshape(-1)
        eye = jnp.eye(group, dtype=jnp.float32)
        w_in = (eye[:, None, :] * w_row[None, :, None]).reshape(_LANE, group).astype(in_dtype)
        kernel_d = _LANE
        row_bytes_in = _LANE * itemsize  # no lane padding wasted
    else:
        # General fallback: any N (partial blocks), any D (lane-padded tile).
        rows = n
        out_cols = 1
        x_in = x.astype(in_dtype)
        w_in = weight.reshape(d, 1).astype(in_dtype)
        kernel_d = d
        row_bytes_in = _round_up(d, _LANE) * itemsize
        # TODO(synk): add a K (feature) grid axis + f32 accumulator for huge D
        # where even a minimal (8, D) row tile would not fit the VMEM budget.

    # Output tile (tile_rows, out_cols) pads its lane dim to 128 in VMEM.
    row_bytes_out = _LANE * 4

    if tile_rows is None:
        tile_rows = _pick_tile_rows(rows, row_bytes_in, row_bytes_out, buffer_budget)
    else:
        tile_rows = int(tile_rows)
    if tile_rows >= rows:
        tile_rows = rows                          # single full-extent block
    else:
        tile_rows = max(8, (tile_rows // 8) * 8)  # sublane-aligned partial blocks
    num_tiles = _cdiv(rows, tile_rows)

    out = pl.pallas_call(
        _linear_bias_kernel,
        out_shape=jax.ShapeDtypeStruct((rows, out_cols), jnp.float32),
        grid_spec=pltpu.PrefetchScalarGridSpec(
            num_scalar_prefetch=0,
            grid=(num_tiles,),
            in_specs=[
                pl.BlockSpec((tile_rows, kernel_d), lambda i: (i, 0)),   # streamed rows
                pl.BlockSpec((kernel_d, out_cols), lambda i: (0, 0)),    # resident weight
                pl.BlockSpec(memory_space=pltpu.MemorySpace.SMEM),       # bias scalar
            ],
            out_specs=pl.BlockSpec((tile_rows, out_cols), lambda i: (i, 0)),
        ),
        compiler_params=pltpu.CompilerParams(
            dimension_semantics=("parallel",),   # shard row grid across v7x's 2 TCs
            vmem_limit_bytes=vmem_limit,
        ),
        cost_estimate=pl.CostEstimate(
            flops=2 * n * d,
            transcendentals=0,
            bytes_accessed=int(x_in.size) * itemsize
            + int(w_in.size) * itemsize
            + 4 * (n + 1),
        ),
    )(x_in, w_in, bias_s)

    return out.reshape(n, 1)


if __name__ == "__main__":
    key = jax.random.PRNGKey(0)
    kx, kw, kb = jax.random.split(key, 3)

    # NetReg with dim_input=32 (small shape consistent with nn.Linear(D, 1)).
    D = 32
    bound = 1.0 / float(D) ** 0.5  # nn.Linear init range
    weight = jax.random.uniform(kw, (1, D), jnp.float32, -bound, bound)
    bias = jax.random.uniform(kb, (1,), jnp.float32, -bound, bound)

    def ref(xv):
        return xv @ weight.T + bias[None, :]

    def check(xv, out, atol=1e-4, rtol=1e-4):
        r = ref(xv)
        assert out.shape == r.shape
        assert jnp.allclose(out, r, atol=atol, rtol=rtol), (
            f"max abs err {jnp.max(jnp.abs(out - r))}")

    # 1) Small batch, lane-packed path (128 % 32 == 0), single full block.
    x1 = jax.random.normal(kx, (8, D), jnp.float32)
    o1 = jax.block_until_ready(netreg_forward(x1, weight, bias))
    check(x1, o1)

    # 2) Lane-packed path, multi-step grid with a partial last block (no pad copy).
    x2 = jax.random.normal(jax.random.PRNGKey(1), (3000, D), jnp.float32)
    o2 = jax.block_until_ready(netreg_forward(x2, weight, bias, tile_rows=256))
    check(x2, o2)

    # 3) General fallback path (N not a multiple of 128//D), partial last block.
    x3 = jax.random.normal(jax.random.PRNGKey(2), (301, D), jnp.float32)
    o3 = jax.block_until_ready(netreg_forward(x3, weight, bias, tile_rows=128))
    check(x3, o3)

    # 4) Opt-in bf16 streaming (review suggestion) — looser tolerance.
    o4 = jax.block_until_ready(netreg_forward(x2, weight, bias, stream_bf16=True))
    check(x2, o4, atol=5e-2, rtol=5e-2)

    print("KERNEL_OK")
</pallas_src>

<mosaic_0001>
module attributes {stable_mosaic.version = 11 : i64} {
  func.func @_linear_bias_kernel(%arg0: i32, %arg1: memref<2x128xf32, #tpu.memory_space<vmem>>, %arg2: memref<128x4xf32, #tpu.memory_space<vmem>>, %arg3: memref<1x1xf32, #tpu.memory_space<smem>>, %arg4: memref<2x4xf32, #tpu.memory_space<vmem>>) attributes {dimension_semantics = [#tpu.dimension_semantics<parallel>], iteration_bounds = array<i64: 1>, scalar_prefetch = 0 : i64, scratch_operands = 0 : i64, tpu.core_type = #tpu.core_type<tc>, window_params = [{transform_indices = @transform_0, window_bounds = array<i64: 2, 128>}, {pipeline_mode = #tpu.pipeline_mode<synchronous>, transform_indices = @transform_1, window_bounds = array<i64: 128, 4>}, {transform_indices = @transform_2, window_bounds = array<i64: 1, 1>}, {transform_indices = @transform_3, window_bounds = array<i64: 2, 4>}]} {
    %c0 = arith.constant 0 : index
    %c0_0 = arith.constant 0 : index
    %0 = vector.load %arg1[%c0, %c0_0] : memref<2x128xf32, #tpu.memory_space<vmem>>, vector<2x128xf32>
    %c0_1 = arith.constant 0 : index
    %c0_2 = arith.constant 0 : index
    %1 = vector.load %arg2[%c0_1, %c0_2] : memref<128x4xf32, #tpu.memory_space<vmem>>, vector<128x4xf32>
    %cst = arith.constant dense<0.000000e+00> : vector<2x4xf32>
    %2 = tpu.matmul %0, %1, %cst {dimension_numbers = #tpu.dot_dimension_numbers<[1], [0], [0], [1], [0, 0, 1, 1], [], []>} : vector<2x128xf32>, vector<128x4xf32>, vector<2x4xf32> -> vector<2x4xf32>
    %c0_3 = arith.constant 0 : index
    %c0_4 = arith.constant 0 : index
    %3 = memref.load %arg3[%c0_3, %c0_4] : memref<1x1xf32, #tpu.memory_space<smem>>
    %4 = vector.broadcast %3 : f32 to vector<2x4xf32>
    %5 = arith.addf %2, %4 : vector<2x4xf32>
    %c0_5 = arith.constant 0 : index
    %c0_6 = arith.constant 0 : index
    %6 = vector.load %arg4[%c0_5, %c0_6] : memref<2x4xf32, #tpu.memory_space<vmem>>, vector<2x4xf32>
    tpu.vector_store %arg4[%c0_5, %c0_6], %5 {strides = array<i32>} : memref<2x4xf32, #tpu.memory_space<vmem>>, vector<2x4xf32>,
    return
  }
  func.func @transform_0(%arg0: i32) -> (i32, i32) {
    %c0_i32 = arith.constant 0 : i32
    %c0_i32_0 = arith.constant 0 : i32
    return %arg0, %c0_i32 : i32, i32
  }
  func.func @transform_1(%arg0: i32) -> (i32, i32) {
    %c0_i32 = arith.constant 0 : i32
    %c0_i32_0 = arith.constant 0 : i32
    %c0_i32_1 = arith.constant 0 : i32
    return %c0_i32, %c0_i32_0 : i32, i32
  }
  func.func @transform_2(%arg0: i32) -> (i32, i32) {
    %c0_i32 = arith.constant 0 : i32
    %c0_i32_0 = arith.constant 0 : i32
    %c0_i32_1 = arith.constant 0 : i32
    return %c0_i32, %c0_i32_0 : i32, i32
  }
  func.func @transform_3(%arg0: i32) -> (i32, i32) {
    %c0_i32 = arith.constant 0 : i32
    %c0_i32_0 = arith.constant 0 : i32
    return %arg0, %c0_i32 : i32, i32
  }
}

</mosaic_0001>

<llo_original>
// kernel: tpu_custom_call.1
$region0: #{tpu_custom_call.1}
  #allocation0 [shape = 'u32[]', space=smem, size = 0x4, offset = 0x4, fixed_abs, tag = 'smem constant byte address 0x4 - core index']
  #allocation1 [shape = 'u32[144,128]{1,0:T(1,128)}', space=vmem, size = 0x12000, scoped, tag = 'internal scratch']
  #allocation2 [shape = 'f32[1,1]{1,0:T(1,128)S(6)}', space=smem, size = 0x200, scoped, tag = 'scoped memory for tpu_custom_call.1']
  %s0 = inlined_call_operand.vmem [shape: f32[2,128], index: 0, kind: input, shape index: {}]
  %s1 = inlined_call_operand.vmem [shape: f32[128,4], index: 1, kind: input, shape index: {}]
  %s2 = inlined_call_operand.<no memory space> [shape: f32[1,1], index: 2, kind: input, shape index: {}]
  %s3 = inlined_call_operand.hbm [shape: f32[2,4], index: 3, kind: output, shape index: {}]
  %s4 = sld [smem:[#allocation0]]
  $region22: #{tpu_custom_call.1} parent=0
    _
  %s6 = ssub.s32 1, %s4
  %s7 = scalar_select 0, %s6, %s4
  %8 = sst [smem:[#allocation2]] %s2
  $region1: #{tpu_custom_call.1} parent=0
    #allocation3 [shape = 'u8[1024]{0}', space=vmem, size = 0x400, scoped, tag = 'output window, operand 0, single buffered']
    #allocation4 [shape = 's32[1]{0}', space=sflag, size = 0x4, scoped, tag = 'scoped memory for tpu_custom_call.1']
    %9 = vsyncpa [#allocation4], 0
    // Predicated region
    $region2: #{tpu_custom_call.1} parent=1 // pred_check
      _
    $region3: #{tpu_custom_call.1} parent=1 // pred_check_branch
      %11 = sbr.rel (0) target = $region5
    $region4: #{tpu_custom_call.1} parent=1 // pred_region
      _
    $region5: #{tpu_custom_call.1} parent=1 // pred_fallthru
      _
    // Predicated region
    $region6: #{tpu_custom_call.1} parent=1 // pred_check
      _
    $region7: #{tpu_custom_call.1} parent=1 // pred_check_branch
      %13 = sbr.rel (0) target = $region9
    $region8: #{tpu_custom_call.1} parent=1 // pred_region
      _
    $region9: #{tpu_custom_call.1} parent=1 // pred_fallthru
      _
    // Predicated region
    $region10: #{tpu_custom_call.1} parent=1 // pred_check
      _
    $region11: #{tpu_custom_call.1} parent=1 // pred_check_branch
      %15 = sbr.rel (0) target = $region13
    $region12: #{tpu_custom_call.1} parent=1 // pred_region
      _
    $region13: #{tpu_custom_call.1} parent=1 // pred_fallthru
      _
    %v16 = vld [vmem:[%s0] sm:$0x3]
    %v17 = vld [vmem:[%s1] sm:$0xff]
    %v18 = vld [vmem:[%s1 + $0x8] sm:$0xff]
    %v19 = vld [vmem:[%s1 + $0x10] sm:$0xff]
    %v20 = vld [vmem:[%s1 + $0x18] sm:$0xff]
    %v21 = vld [vmem:[%s1 + $0x20] sm:$0xff]
    %v22 = vld [vmem:[%s1 + $0x28] sm:$0xff]
    %v23 = vld [vmem:[%s1 + $0x30] sm:$0xff]
    %v24 = vld [vmem:[%s1 + $0x38] sm:$0xff]
    %v25 = vld [vmem:[%s1 + $0x40] sm:$0xff]
    %v26 = vld [vmem:[%s1 + $0x48] sm:$0xff]
    %v27 = vld [vmem:[%s1 + $0x50] sm:$0xff]
    %v28 = vld [vmem:[%s1 + $0x58] sm:$0xff]
    %v29 = vld [vmem:[%s1 + $0x60] sm:$0xff]
    %v30 = vld [vmem:[%s1 + $0x68] sm:$0xff]
    %v31 = vld [vmem:[%s1 + $0x70] sm:$0xff]
    %v32 = vld [vmem:[%s1 + $0x78] sm:$0xff]
    %s33 = sld [smem:[#allocation2]]
    %v34 = vstv %s33
    %35 = vmatprep.subr.mxu0 0.0
    %36 = vmatpush1.msra.mxu0 %v32
    %37 = vmatprep.subr.mxu0 0.0
    %38 = vmatpush1.msra.mxu0 %v31
    %39 = vmatprep.subr.mxu0 0.0
    %40 = vmatpush1.msra.mxu0 %v30
    %41 = vmatprep.subr.mxu0 0.0
    %42 = vmatpush1.msra.mxu0 %v29
    %43 = vmatprep.subr.mxu0 0.0
    %44 = vmatpush1.msra.mxu0 %v28
    %45 = vmatprep.subr.mxu0 0.0
    %46 = vmatpush1.msra.mxu0 %v27
    %47 = vmatprep.subr.mxu0 0.0
    %48 = vmatpush1.msra.mxu0 %v26
    %49 = vmatprep.subr.mxu0 0.0
    %50 = vmatpush1.msra.mxu0 %v25
    %51 = vmatprep.subr.mxu0 0.0
    %52 = vmatpush1.msra.mxu0 %v24
    %53 = vmatprep.subr.mxu0 0.0
    %54 = vmatpush1.msra.mxu0 %v23
    %55 = vmatprep.subr.mxu0 0.0
    %56 = vmatpush1.msra.mxu0 %v22
    %57 = vmatprep.subr.mxu0 0.0
    %58 = vmatpush1.msra.mxu0 %v21
    %59 = vmatprep.subr.mxu0 0.0
    %60 = vmatpush1.msra.mxu0 %v20
    %61 = vmatprep.subr.mxu0 0.0
    %62 = vmatpush1.msra.mxu0 %v19
    %63 = vmatprep.subr.mxu0 0.0
    %64 = vmatpush1.msra.mxu0 %v18
    %65 = vmatprep.subr.mxu0 0.0
    %66 = vmatpush1.msra.mxu0 %v17
    %67 = vmatprep.subr.mxu0 0.0
    %68 = vmatpush2.msra.mxu0 0.0
    %69 = vmatprep.subr.mxu0 0.0
    %70 = vmatpush2.msra.mxu0 0.0
    %71 = vmatprep.subr.mxu0 0.0
    %72 = vmatpush2.msra.mxu0 0.0
    %73 = vmatprep.subr.mxu0 0.0
    %74 = vmatpush2.msra.mxu0 0.0
    %75 = vmatprep.subr.mxu0 0.0
    %76 = vmatpush2.msra.mxu0 0.0
    %77 = vmatprep.subr.mxu0 0.0
    %78 = vmatpush2.msra.mxu0 0.0
    %79 = vmatprep.subr.mxu0 0.0
    %80 = vmatpush2.msra.mxu0 0.0
    %81 = vmatprep.subr.mxu0 0.0
    %82 = vmatpush2.msra.mxu0 0.0
    %83 = vmatprep.subr.mxu0 0.0
    %84 = vmatpush2.msra.mxu0 0.0
    %85 = vmatprep.subr.mxu0 0.0
    %86 = vmatpush2.msra.mxu0 0.0
    %87 = vmatprep.subr.mxu0 0.0
    %88 = vmatpush2.msra.mxu0 0.0
    %89 = vmatprep.subr.mxu0 0.0
    %90 = vmatpush2.msra.mxu0 0.0
    %91 = vmatprep.subr.mxu0 0.0
    %92 = vmatpush2.msra.mxu0 0.0
    %93 = vmatprep.subr.mxu0 0.0
    %94 = vmatpush2.msra.mxu0 0.0
    %95 = vmatprep.subr.mxu0 0.0
    %96 = vmatpush2.msra.mxu0 0.0
    %97 = vmatprep.subr.mxu0 0.0
    %98 = vmatpush2.msra.mxu0 0.0
    %99 = vmatprep.mubr.f32.mxu0 0.0
    %100 = vmatmul.mubr.f32.gmra.mxu0 %v16
    %v101 = vpop.f32.mrf.mxu0
    %v102 = vadd.f32 %v34, %v101
    %v103 = vpop.f32.mrf.mxu0
    %104 = vdwg.mxu0
    %vm105 = vcmask 25600
    %106 = vst.msk [vmem:[#allocation3] sm:$0x3] %vm105, %v102
    // Predicated region
    $region14: #{tpu_custom_call.1} parent=1 // pred_check
      _
    $region15: #{tpu_custom_call.1} parent=1 // pred_check_branch
      %108 = sbr.rel (0) target = $region17
    $region16: #{tpu_custom_call.1} parent=1 // pred_region
      %s110 = ssub.s32 32, 32
      %111 = vsyncadd [#allocation4], %s110
      %s113 = sshll.u32 [#allocation3], 4
      %s114 = int_to_ptr.vmem [resolvable:$true] %s113
      %116 = dma.vmem_to_hbm [thread:$0]  %s114, 32, %s3, [#allocation4]
    $region17: #{tpu_custom_call.1} parent=1 // pred_fallthru
      _
    // Predicated region
    $region18: #{tpu_custom_call.1} parent=1 // pred_check
      _
    $region19: #{tpu_custom_call.1} parent=1 // pred_check_branch
      %118 = sbr.rel (0) target = $region21
    $region20: #{tpu_custom_call.1} parent=1 // pred_region
      %119 = dma.done [#allocation4], 32
    $region21: #{tpu_custom_call.1} parent=1 // pred_fallthru
      _
    %120 = vsyncpa [#allocation4], 1

</llo_original>
